<compile_context>
chip_gen: v7x
topology: tpu7x:2x2x1
jax: 0.10.0
libtpu: 0.0.40
codegen_flags: <defaults>
</compile_context>

<pallas_src>
import functools
import numpy as np
import jax
import jax.numpy as jnp
from jax.experimental import pallas as pl
from jax.experimental.pallas import tpu as pltpu


# ---------------------------------------------------------------------------
# Sinusoid table (the module's non-learnable buffer), built in-script.
# ---------------------------------------------------------------------------
def _sinusoid_table(n_position: int, d_hid: int, dtype=jnp.float32) -> jnp.ndarray:
    pos = np.arange(n_position, dtype=np.float64)[:, None]
    hid = np.arange(d_hid, dtype=np.float64)[None, :]
    angle = pos / np.power(10000.0, 2.0 * (hid // 2) / d_hid)
    table = np.empty((n_position, d_hid), dtype=np.float64)
    table[:, 0::2] = np.sin(angle[:, 0::2])
    table[:, 1::2] = np.cos(angle[:, 1::2])
    return jnp.asarray(table, dtype=dtype)


# ---------------------------------------------------------------------------
# Kernel (shared by both tilings)
# ---------------------------------------------------------------------------
def _add_pos_kernel(x_ref, pos_ref, o_ref):
    # seq-tiled path:   x_ref/o_ref (tS, D),     pos_ref (tS, D)  -> plain add
    # batch-fold path:  x_ref/o_ref (tB, S, D),  pos_ref (S, D)   -> broadcast
    # over the leading (non-vreg) dim; pure VPU work either way.
    o_ref[...] = x_ref[...] + pos_ref[...]


# ---------------------------------------------------------------------------
# Trace-time tile selection (static shapes)
# ---------------------------------------------------------------------------
def _tile_budget():
    """(target_tile_bytes, vmem_limit_bytes) tuned per TPU generation."""
    try:
        kind = jax.devices()[0].device_kind.lower()
    except Exception:
        kind = ""
    if "v6" in kind:
        # 128 MiB physical VMEM: larger tiles + raised scoped-VMEM limit.
        return 4 << 20, 64 << 20
    if "v7" in kind or "7x" in kind:
        # 64 MiB VMEM/TC: 4 MiB tiles keep 2x(in)+2x(out)+2x(pos) ~ 24 MiB,
        # under the 32 MiB scoped default.
        return 4 << 20, None
    # v5e (16 MiB scoped default) / unknown: conservative.
    return 2 << 20, None


def _row_quantum(itemsize: int) -> int:
    # Packed-sublane quantum: 8 rows f32, 16 rows bf16, 32 rows int8/fp8.
    return max(8, 32 // max(1, itemsize))


def _seq_tile(S: int, D: int, itemsize: int, target_bytes: int) -> int:
    quantum = _row_quantum(itemsize)
    row_bytes = max(1, D * itemsize)
    budget_rows = max(1, target_bytes // row_bytes)
    return max(quantum, (budget_rows // quantum) * quantum)


def _batch_tile(B: int, S: int, D: int, itemsize: int, target_bytes: int) -> int:
    s_pad = ((S + 7) // 8) * 8  # sublane padding of the per-batch slab
    slab = max(1, s_pad * D * itemsize)
    tB = max(1, min(B, target_bytes // slab))
    if B >= 2:
        # Keep >= 2 grid steps so both v7x TensorCores get work (the extra
        # ~0.35 us step is negligible on single-TC v5e/v6e).
        tB = min(tB, pl.cdiv(B, 2))
    return tB


# ---------------------------------------------------------------------------
# pallas_call wrappers
# ---------------------------------------------------------------------------
def _pe_seq_tiled(x, pos, tS, vmem_limit):
    B, S, D = x.shape
    grid = (pl.cdiv(S, tS), B)  # seq outer, batch inner -> pos tile reused across B
    cp = dict(dimension_semantics=("parallel", "parallel"))
    if vmem_limit is not None:
        cp["vmem_limit_bytes"] = vmem_limit
    return pl.pallas_call(
        _add_pos_kernel,
        out_shape=jax.ShapeDtypeStruct((B, S, D), x.dtype),
        grid_spec=pltpu.PrefetchScalarGridSpec(
            num_scalar_prefetch=0,
            grid=grid,
            in_specs=[
                pl.BlockSpec((pl.Squeezed(), tS, D), lambda s, b: (b, s, 0)),
                pl.BlockSpec((tS, D), lambda s, b: (s, 0)),
            ],
            out_specs=pl.BlockSpec((pl.Squeezed(), tS, D), lambda s, b: (b, s, 0)),
        ),
        compiler_params=pltpu.CompilerParams(**cp),
    )(x, pos)


def _pe_batch_tiled(x, pos, tB, vmem_limit):
    B, S, D = x.shape
    grid = (pl.cdiv(B, tB),)
    cp = dict(dimension_semantics=("parallel",))
    if vmem_limit is not None:
        cp["vmem_limit_bytes"] = vmem_limit
    return pl.pallas_call(
        _add_pos_kernel,
        out_shape=jax.ShapeDtypeStruct((B, S, D), x.dtype),
        grid_spec=pltpu.PrefetchScalarGridSpec(
            num_scalar_prefetch=0,
            grid=grid,
            in_specs=[
                pl.BlockSpec((tB, S, D), lambda b: (b, 0, 0)),
                # Constant block index -> pos is DMAed once and revisited.
                pl.BlockSpec((S, D), lambda b: (0, 0)),
            ],
            out_specs=pl.BlockSpec((tB, S, D), lambda b: (b, 0, 0)),
        ),
        compiler_params=pltpu.CompilerParams(**cp),
    )(x, pos)


@functools.partial(jax.jit, static_argnames=("target_tile_bytes",))
def positional_encoding(x, pos_table, *, target_tile_bytes=None):
    """x: (B, S, D); pos_table: (n_position, D). Returns x + pos_table[:S]."""
    B, S, D = x.shape
    n_position = pos_table.shape[0]
    if S > n_position:
        raise ValueError(
            f"sequence length {S} exceeds pos_table n_position {n_position}")

    pos = pos_table[:S, :]  # static slice
    if pos.dtype != x.dtype:
        # NOTE: store the table in the activation dtype at init to skip this
        # per-call convert (it is an extra HBM read/write of the table).
        pos = pos.astype(x.dtype)

    if target_tile_bytes is not None:
        target, vmem_limit = target_tile_bytes, None
    else:
        target, vmem_limit = _tile_budget()

    itemsize = jnp.dtype(x.dtype).itemsize
    tS = _seq_tile(S, D, itemsize, target)
    if tS < S:
        return _pe_seq_tiled(x, pos, tS, vmem_limit)
    tB = _batch_tile(B, S, D, itemsize, target)
    return _pe_batch_tiled(x, pos, tB, vmem_limit)


if __name__ == "__main__":
    # Config 1: the module's demo shape (B=2, S=8, D=32) -> batch-folded path.
    B, S, D = 2, 8, 32
    n_position = 200
    x = jax.random.normal(jax.random.PRNGKey(0), (B, S, D), dtype=jnp.float32)
    tbl = _sinusoid_table(n_position, D)
    ref = x + tbl[None, :S, :]
    out = jax.block_until_ready(positional_encoding(x, tbl))
    assert out.shape == (B, S, D)
    assert jnp.allclose(out, ref, atol=1e-6), "mismatch (batch-fold path, tB=1)"

    # Config 1b: B=4 so the batch-folded path uses tB=2 with in-kernel broadcast.
    x1b = jax.random.normal(jax.random.PRNGKey(0), (4, S, D), dtype=jnp.float32)
    ref1b = x1b + tbl[None, :S, :]
    out1b = jax.block_until_ready(positional_encoding(x1b, tbl))
    assert jnp.allclose(out1b, ref1b, atol=1e-6), "mismatch (batch-fold path, tB>1)"

    # Config 2: f32, S=44 (not a multiple of 8), D=128; tiny byte target forces
    # the cdiv seq-tiled path with a masked partial last block.
    B2, S2, D2 = 2, 44, 128
    x2 = jax.random.normal(jax.random.PRNGKey(0), (B2, S2, D2), dtype=jnp.float32)
    tbl2 = _sinusoid_table(64, D2)
    ref2 = x2 + tbl2[None, :S2, :]
    out2 = jax.block_until_ready(
        positional_encoding(x2, tbl2, target_tile_bytes=8 * 128 * 4))
    assert out2.shape == (B2, S2, D2)
    assert jnp.allclose(out2, ref2, atol=1e-6), "mismatch (seq-tiled path, f32)"

    # Config 3: bf16 (row quantum 16) seq-tiled path; table cast once at trace time.
    B3, S3, D3 = 3, 24, 128
    x3 = jax.random.normal(jax.random.PRNGKey(0), (B3, S3, D3)).astype(jnp.bfloat16)
    tbl3 = _sinusoid_table(64, D3)
    ref3 = x3 + tbl3[None, :S3, :].astype(jnp.bfloat16)
    out3 = jax.block_until_ready(
        positional_encoding(x3, tbl3, target_tile_bytes=16 * 128 * 2))
    assert out3.shape == (B3, S3, D3)
    assert jnp.allclose(out3.astype(jnp.float32), ref3.astype(jnp.float32),
                        atol=1e-2), "mismatch (seq-tiled path, bf16)"

    print("KERNEL_OK")
</pallas_src>

<mosaic_0001>
module attributes {stable_mosaic.version = 11 : i64} {
  func.func @_add_pos_kernel(%arg0: i32, %arg1: memref<1x8x32xf32, #tpu.memory_space<vmem>>, %arg2: memref<8x32xf32, #tpu.memory_space<vmem>>, %arg3: memref<1x8x32xf32, #tpu.memory_space<vmem>>) attributes {dimension_semantics = [#tpu.dimension_semantics<parallel>], iteration_bounds = array<i64: 2>, scalar_prefetch = 0 : i64, scratch_operands = 0 : i64, tpu.core_type = #tpu.core_type<tc>, window_params = [{transform_indices = @transform_0, window_bounds = array<i64: 1, 8, 32>}, {pipeline_mode = #tpu.pipeline_mode<synchronous>, transform_indices = @transform_1, window_bounds = array<i64: 8, 32>}, {transform_indices = @transform_2, window_bounds = array<i64: 1, 8, 32>}]} {
    %c0 = arith.constant 0 : index
    %c0_0 = arith.constant 0 : index
    %c0_1 = arith.constant 0 : index
    %0 = vector.load %arg1[%c0, %c0_0, %c0_1] : memref<1x8x32xf32, #tpu.memory_space<vmem>>, vector<1x8x32xf32>
    %c0_2 = arith.constant 0 : index
    %c0_3 = arith.constant 0 : index
    %1 = vector.load %arg2[%c0_2, %c0_3] : memref<8x32xf32, #tpu.memory_space<vmem>>, vector<8x32xf32>
    %2 = vector.shape_cast %1 : vector<8x32xf32> to vector<1x8x32xf32>
    %3 = arith.addf %0, %2 : vector<1x8x32xf32>
    %c0_4 = arith.constant 0 : index
    %c0_5 = arith.constant 0 : index
    %c0_6 = arith.constant 0 : index
    %4 = vector.load %arg3[%c0_4, %c0_5, %c0_6] : memref<1x8x32xf32, #tpu.memory_space<vmem>>, vector<1x8x32xf32>
    tpu.vector_store %arg3[%c0_4, %c0_5, %c0_6], %3 {strides = array<i32>} : memref<1x8x32xf32, #tpu.memory_space<vmem>>, vector<1x8x32xf32>,
    return
  }
  func.func @transform_0(%arg0: i32) -> (i32, i32, i32) {
    %c0_i32 = arith.constant 0 : i32
    %c0_i32_0 = arith.constant 0 : i32
    %c0_i32_1 = arith.constant 0 : i32
    return %arg0, %c0_i32, %c0_i32_0 : i32, i32, i32
  }
  func.func @transform_1(%arg0: i32) -> (i32, i32) {
    %c0_i32 = arith.constant 0 : i32
    %c0_i32_0 = arith.constant 0 : i32
    %c0_i32_1 = arith.constant 0 : i32
    return %c0_i32, %c0_i32_0 : i32, i32
  }
  func.func @transform_2(%arg0: i32) -> (i32, i32, i32) {
    %c0_i32 = arith.constant 0 : i32
    %c0_i32_0 = arith.constant 0 : i32
    %c0_i32_1 = arith.constant 0 : i32
    return %arg0, %c0_i32, %c0_i32_0 : i32, i32, i32
  }
}

</mosaic_0001>

<llo_original>
// kernel: positional_encoding.1
$region0: #{positional_encoding.1}
  #allocation0 [shape = 'u32[]', space=smem, size = 0x4, offset = 0x4, fixed_abs, tag = 'smem constant byte address 0x4 - core index']
  #allocation1 [shape = 'u32[144,128]{1,0:T(1,128)}', space=vmem, size = 0x12000, scoped, tag = 'internal scratch']
  %s0 = inlined_call_operand.vmem [shape: f32[2,8,32], index: 0, kind: input, shape index: {}]
  %s1 = inlined_call_operand.vmem [shape: f32[8,32], index: 1, kind: input, shape index: {}]
  %s2 = inlined_call_operand.hbm [shape: f32[2,8,32], index: 2, kind: output, shape index: {}]
  %s3 = sld [smem:[#allocation0]]
  $region41: #{positional_encoding.1} parent=0
    _
  %s5 = ssub.s32 1, %s3
  %s6 = scalar_select 0, %s5, %s3
  $region1: #{positional_encoding.1} parent=0
    #allocation2 [shape = 'u8[8192]{0}', space=vmem, size = 0x2000, scoped, tag = 'output window, operand 0']
    #allocation3 [shape = 's32[2]{0}', space=sflag, size = 0x8, scoped, tag = 'scoped memory for positional_encoding.1']
    %7 = vsyncpa [#allocation3], 0
    %s8 = scalar_lea.sflag [#allocation3], 1
    %9 = vsyncpa %s8, 0
    loop: start=0, step=1, limit=4
    $region2: #{positional_encoding.1} parent=1 // loop_pre_header
      _
    $region3: #{positional_encoding.1} parent=1 // loop_header
      %s11 = sphi 0, %s15
      %p12 = scmp.ge.s32.totalorder %s11, 4
      %s21 = sphi 0, %s23
      %s24 = sphi 0, %s21
      %s25 = sphi 0, %s24
      %s41 = sphi 0, %s25
      %s45 = sphi 0, %s45
      %s47 = sphi 0, %s45
      %s48 = sphi 0, %s47
      %s62 = sphi 0, %s48
      %s68 = sphi 0, %s70
      %s71 = sphi 0, %s68
      %s72 = sphi 0, %s71
      %s88 = sphi 0, %s72
    $region4: #{positional_encoding.1} parent=1 // loop_header_branch
      %14 = sbr.rel (%p12) target = $region8
    $region5: #{positional_encoding.1} parent=1 // loop_body
      %s16 = ssub.s32 %s11, 1
      %s17 = ssub.s32 %s11, 2
      %s18 = sadd.s32 %s11, 1
      %s19 = ssub.s32 %s11, %s18
      %p20 = scmp.eq.s32.totalorder %s19, 0
      %s22 = sadd.s32 %s21, 1
      %s23 = scalar_select %p20, %s21, %s22
      %p26 = pneg %p20
      %p27 = scmp.eq.s32.totalorder %s11, 1
      %p28 = por %p26, %p27
      %p29 = scmp.ne.s32.totalorder %s21, %s24
      %p30 = scmp.eq.s32.totalorder %s11, 0
      %p31 = por %p29, %p30
      %p32 = scmp.ne.s32.totalorder %s21, %s24
      %p33 = scmp.eq.s32.totalorder %s16, 1
      %p34 = por %p32, %p33
      %p35 = scmp.ne.s32.totalorder %s24, %s25
      %p36 = scmp.eq.s32.totalorder %s16, 0
      %p37 = por %p35, %p36
      %p38 = scmp.ne.s32.totalorder %s24, %s25
      %p39 = scmp.eq.s32.totalorder %s17, 1
      %p40 = por %p38, %p39
      %p42 = scmp.ne.s32.totalorder %s25, %s41
      %p43 = scmp.eq.s32.totalorder %s17, 0
      %p44 = por %p42, %p43
      %s46 = sadd.s32 %s45, 1
      %p49 = scmp.eq.s32.totalorder %s11, 1
      %p50 = scmp.ne.s32.totalorder %s45, %s47
      %p51 = scmp.eq.s32.totalorder %s11, 0
      %p52 = por %p50, %p51
      %p53 = scmp.ne.s32.totalorder %s45, %s47
      %p54 = scmp.eq.s32.totalorder %s16, 1
      %p55 = por %p53, %p54
      %p56 = scmp.ne.s32.totalorder %s47, %s48
      %p57 = scmp.eq.s32.totalorder %s16, 0
      %p58 = por %p56, %p57
      %p59 = scmp.ne.s32.totalorder %s47, %s48
      %p60 = scmp.eq.s32.totalorder %s17, 1
      %p61 = por %p59, %p60
      %p63 = scmp.ne.s32.totalorder %s48, %s62
      %p64 = scmp.eq.s32.totalorder %s17, 0
      %p65 = por %p63, %p64
      %s66 = ssub.s32 %s11, %s18
      %p67 = scmp.eq.s32.totalorder %s66, 0
      %s69 = sadd.s32 %s68, 1
      %s70 = scalar_select %p67, %s68, %s69
      %p73 = pneg %p67
      %p74 = scmp.eq.s32.totalorder %s11, 1
      %p75 = por %p73, %p74
      %p76 = scmp.ne.s32.totalorder %s68, %s71
      %p77 = scmp.eq.s32.totalorder %s11, 0
      %p78 = por %p76, %p77
      %p79 = scmp.ne.s32.totalorder %s68, %s71
      %p80 = scmp.eq.s32.totalorder %s16, 1
      %p81 = por %p79, %p80
      %p82 = scmp.ne.s32.totalorder %s71, %s72
      %p83 = scmp.eq.s32.totalorder %s16, 0
      %p84 = por %p82, %p83
      %p85 = scmp.ne.s32.totalorder %s71, %s72
      %p86 = scmp.eq.s32.totalorder %s17, 1
      %p87 = por %p85, %p86
      %p89 = scmp.ne.s32.totalorder %s72, %s88
      %p90 = scmp.eq.s32.totalorder %s17, 0
      %p91 = por %p89, %p90
      %p92 = scmp.le.s32.totalorder 1, %s11
      %p93 = scmp.lt.s32.totalorder %s11, 3
      %p94 = pnand %p92, %p93
      %p95 = pneg %p94
      // Predicated region
      $region9: #{positional_encoding.1} parent=5 // pred_check
        _
      $region10: #{positional_encoding.1} parent=5 // pred_check_branch
        %97 = sbr.rel (%p94) target = $region12
      $region11: #{positional_encoding.1} parent=5 // pred_region
        %s98 = ssub.s32 %s11, 1
        // Predicated region
        $region13: #{positional_encoding.1} parent=11 // pred_check
          %p99 = pneg %p58
        $region14: #{positional_encoding.1} parent=11 // pred_check_branch
          %101 = sbr.rel (%p99) target = $region16
        $region15: #{positional_encoding.1} parent=11 // pred_region
          _
        $region16: #{positional_encoding.1} parent=11 // pred_fallthru
          _
      $region12: #{positional_encoding.1} parent=5 // pred_fallthru
        _
      %p102 = scmp.lt.s32.totalorder %s11, 2
      // Predicated region
      $region17: #{positional_encoding.1} parent=5 // pred_check
        %p103 = pneg %p102
      $region18: #{positional_encoding.1} parent=5 // pred_check_branch
        %105 = sbr.rel (%p103) target = $region20
      $region19: #{positional_encoding.1} parent=5 // pred_region
        // Predicated region
        $region21: #{positional_encoding.1} parent=19 // pred_check
          %p106 = pneg %p31
        $region22: #{positional_encoding.1} parent=19 // pred_check_branch
          %108 = sbr.rel (%p106) target = $region24
        $region23: #{positional_encoding.1} parent=19 // pred_region
          %p109 = scmp.lt.s32.totalorder %s11, 1
          %s110 = scalar_select %p109, %s11, 1
          %s111 = smul.addr %s110, 8
          %s112 = scalar_lea.vmem %s0, %s111
        $region24: #{positional_encoding.1} parent=19 // pred_fallthru
          _
      $region20: #{positional_encoding.1} parent=5 // pred_fallthru
        _
      %p113 = scmp.le.s32.totalorder 1, %s11
      %p114 = scmp.lt.s32.totalorder %s11, 3
      %p115 = pnand %p113, %p114
      %p116 = pneg %p115
      // Predicated region
      $region25: #{positional_encoding.1} parent=5 // pred_check
        _
      $region26: #{positional_encoding.1} parent=5 // pred_check_branch
        %118 = sbr.rel (%p115) target = $region28
      $region27: #{positional_encoding.1} parent=5 // pred_region
        %s119 = ssub.s32 %s11, 1
        %p120 = scmp.lt.s32.totalorder %s16, 1
        %s121 = scalar_select %p120, %s16, 1
        %s122 = smul.addr %s121, 8
        %s123 = scalar_lea.vmem %s0, %s122
        %p124 = pneg %p37
        %p125 = pneg %p34
        %p126 = pneg %p58
        %p127 = pneg %p55
        %p128 = pneg %p84
        %p129 = pneg %p81
        %s130 = sand.u32 %s71, 1
        %s131 = scalar_lea.sflag [#allocation3], %s130
        %s132 = sand.u32 %s71, 1
        %s133 = smul.addr %s132, 8
        %s134 = scalar_lea.vmem [#allocation2], %s133
        %p135 = scmp.lt.s32.totalorder %s16, 1
        %s136 = scalar_select %p135, %s16, 1
        %s137 = smul.addr %s136, 8
        %s138 = scalar_lea.vmem %s0, %s137
        %v139 = vld [vmem:[%s138] sm:$0xff]
        %v140 = vld [vmem:[%s1] sm:$0xff]
        %v141 = vadd.f32 %v139, %v140
        %vm142 = vcmask 261120
        %143 = vst.msk [vmem:[%s134] sm:$0xff] %vm142, %v141
        %s144 = sand.u32 %s71, 1
        %s145 = scalar_lea.sflag [#allocation3], %s144
        %s146 = sand.u32 %s71, 1
        %s147 = smul.addr %s146, 8
        %s148 = scalar_lea.vmem [#allocation2], %s147
        // Predicated region
        $region29: #{positional_encoding.1} parent=27 // pred_check
          %p149 = pneg %p81
        $region30: #{positional_encoding.1} parent=27 // pred_check_branch
          %151 = sbr.rel (%p149) target = $region32
        $region31: #{positional_encoding.1} parent=27 // pred_region
          %s153 = ssub.s32 128, 128
          %154 = vsyncadd %s145, %s153
          %s155 = smul.addr %s16, 128
          %s156 = scalar_lea.hbm %s2, %s155
          %s158 = sshll.u32 %s148, 4
          %s159 = int_to_ptr.vmem [resolvable:$true] %s158
          %161 = dma.vmem_to_hbm [thread:$0]  %s159, 128, %s156, %s145
        $region32: #{positional_encoding.1} parent=27 // pred_fallthru
          _
      $region28: #{positional_encoding.1} parent=5 // pred_fallthru
        _
      %p162 = scmp.le.s32.totalorder 2, %s11
      // Predicated region
      $region33: #{positional_encoding.1} parent=5 // pred_check
        %p163 = pneg %p162
      $region34: #{positional_encoding.1} parent=5 // pred_check_branch
        %165 = sbr.rel (%p163) target = $region36
      $region35: #{positional_encoding.1} parent=5 // pred_region
        %s166 = ssub.s32 %s11, 2
        // Predicated region
        $region37: #{positional_encoding.1} parent=35 // pred_check
          %p167 = pneg %p87
        $region38: #{positional_encoding.1} parent=35 // pred_check_branch
          %169 = sbr.rel (%p167) target = $region40
        $region39: #{positional_encoding.1} parent=35 // pred_region
          %s170 = sand.u32 %s72, 1
          %s171 = scalar_lea.sflag [#allocation3], %s170
          %s172 = sand.u32 %s72, 1
          %s173 = smul.addr %s172, 8
          %s174 = scalar_lea.vmem [#allocation2], %s173
          %175 = dma.done %s171, 128
        $region40: #{positional_encoding.1} parent=35 // pred_fallthru
          _
      $region36: #{positional_encoding.1} parent=5 // pred_fallthru
        _
    $region6: #{positional_encoding.1} parent=1 // loop_footer
      %s15 = sadd.s32 1, %s11
    $region7: #{positional_encoding.1} parent=1 // loop_footer_branch
      %10 = sbr.rel target = $region3
    $region8: #{positional_encoding.1} parent=1 // loop_exit
      _
    %176 = vsyncpa [#allocation3], 1
    %s177 = scalar_lea.sflag [#allocation3], 1
    %178 = vsyncpa %s177, 1

</llo_original>
